<compile_context>
chip_gen: v5e
topology: v5e:2x2
jax: 0.10.0
libtpu: 0.0.40
codegen_flags: <defaults>
</compile_context>

<pallas_src>
import jax
import jax.numpy as jnp
from jax.experimental import pallas as pl
from jax.experimental.pallas import tpu as pltpu

NEG_SLOPE = 0.01  # torch.nn.LeakyReLU default


def _leaky_relu(x):
    return jnp.where(x > 0, x, NEG_SLOPE * x)


def _round_up(x, m):
    return ((x + m - 1) // m) * m


def disp_predictor_kernel(z_ref,
                          w1_ref, b1_ref,
                          w2_ref, b2_ref,
                          w3_ref, b3_ref,
                          w4_ref, b4_ref,
                          o_ref):
    # z tile: (TB, latent) bf16.  Weights w1..w3 bf16, biases f32.
    h = jnp.dot(z_ref[...], w1_ref[...],
                preferred_element_type=jnp.float32) + b1_ref[...]
    h = _leaky_relu(h)          # Dropout(0.2) -> identity at inference.

    h = jnp.dot(h.astype(jnp.bfloat16), w2_ref[...],
                preferred_element_type=jnp.float32) + b2_ref[...]
    h = _leaky_relu(h)          # Dropout(0.2) -> identity at inference.

    h = jnp.dot(h.astype(jnp.bfloat16), w3_ref[...],
                preferred_element_type=jnp.float32) + b3_ref[...]
    h = _leaky_relu(h)

    if w4_ref.shape[0] == 1:
        # output_dim == 1: w4 is passed as a (1, 32) f32 row.  A (TB,32)x(32,1)
        # MXU matmul is almost pure push/drain latency, so do it on the
        # VPU (+ lane reduce) instead.
        out = jnp.sum(h * w4_ref[...].astype(jnp.float32),
                      axis=-1, keepdims=True) + b4_ref[...]
    else:
        out = jnp.dot(h.astype(jnp.bfloat16), w4_ref[...],
                      preferred_element_type=jnp.float32) + b4_ref[...]

    o_ref[...] = out.astype(o_ref.dtype)


def _resident_spec(arr):
    """Full-array block with a constant index_map -> stays VMEM-resident."""
    return pl.BlockSpec(arr.shape, lambda i: (0, 0))


def disp_predictor_forward(z, params, tile_b=1024):
    """z: (B, latent_dim) float32. params: dict of f32 weights/biases.

    Returns (B, output_dim) float32.
    """
    B, latent = z.shape
    w4 = params["w4"]
    out_dim = w4.shape[1]

    # ---- batch tiling (TB rows per grid step, pad the tail) ----------------
    TB = max(8, min(tile_b, _round_up(B, 8)))
    B_pad = _round_up(B, TB)
    z_p = jnp.pad(z, ((0, B_pad - B), (0, 0))) if B_pad != B else z

    # ---- bf16 for the HBM-heavy operands; f32 accumulation in-kernel -------
    z_bf = z_p.astype(jnp.bfloat16)
    w1 = params["w1"].astype(jnp.bfloat16)
    w2 = params["w2"].astype(jnp.bfloat16)
    w3 = params["w3"].astype(jnp.bfloat16)
    b1, b2, b3, b4 = params["b1"], params["b2"], params["b3"], params["b4"]
    if out_dim == 1:
        w4_arg = w4.T.astype(jnp.float32)      # (1, 32) row for the VPU path
    else:
        w4_arg = w4.astype(jnp.bfloat16)       # (32, out_dim) for the MXU path

    grid = (B_pad // TB,)

    in_specs = [
        pl.BlockSpec((TB, latent), lambda i: (i, 0)),   # z: tiled over batch
        _resident_spec(w1), _resident_spec(b1),
        _resident_spec(w2), _resident_spec(b2),
        _resident_spec(w3), _resident_spec(b3),
        _resident_spec(w4_arg), _resident_spec(b4),
    ]
    out_spec = pl.BlockSpec((TB, out_dim), lambda i: (i, 0))

    h1, h2, h3 = params["w1"].shape[1], params["w2"].shape[1], params["w3"].shape[1]
    weight_bytes = sum(int(a.size) * a.dtype.itemsize
                       for a in (w1, b1, w2, b2, w3, b3, w4_arg, b4))
    cost = pl.CostEstimate(
        flops=2 * B_pad * (latent * h1 + h1 * h2 + h2 * h3 + h3 * out_dim),
        transcendentals=0,
        bytes_accessed=int(B_pad * (latent * 2 + out_dim * 4) + weight_bytes),
    )

    out = pl.pallas_call(
        disp_predictor_kernel,
        out_shape=jax.ShapeDtypeStruct((B_pad, out_dim), jnp.float32),
        grid=grid,
        in_specs=in_specs,
        out_specs=out_spec,
        compiler_params=pltpu.CompilerParams(
            dimension_semantics=("parallel",)),   # megacore split on v7x
        cost_estimate=cost,
    )(z_bf, w1, b1, w2, b2, w3, b3, w4_arg, b4)

    return out[:B] if B_pad != B else out


def init_params(key, latent_dim=64, output_dim=1):
    """Deterministic init mimicking nn.Linear default (U[-1/sqrt(fan_in), +])."""
    dims = [(latent_dim, 128), (128, 64), (64, 32), (32, output_dim)]
    params = {}
    for i, (fan_in, fan_out) in enumerate(dims, start=1):
        key, kw, kb = jax.random.split(key, 3)
        bound = 1.0 / jnp.sqrt(float(fan_in))
        params[f"w{i}"] = jax.random.uniform(
            kw, (fan_in, fan_out), jnp.float32, minval=-bound, maxval=bound)
        params[f"b{i}"] = jax.random.uniform(
            kb, (1, fan_out), jnp.float32, minval=-bound, maxval=bound)
    return params


def reference_forward_f32(z, params):
    h = _leaky_relu(z @ params["w1"] + params["b1"])
    h = _leaky_relu(h @ params["w2"] + params["b2"])
    h = _leaky_relu(h @ params["w3"] + params["b3"])
    return h @ params["w4"] + params["b4"]


def reference_forward_bf16(z, params):
    """Same cast pattern as the kernel (bf16 operands, f32 accumulation)."""
    def mm(a, w):
        return jnp.dot(a.astype(jnp.bfloat16), w.astype(jnp.bfloat16),
                       preferred_element_type=jnp.float32)
    h = _leaky_relu(mm(z, params["w1"]) + params["b1"])
    h = _leaky_relu(mm(h, params["w2"]) + params["b2"])
    h = _leaky_relu(mm(h, params["w3"]) + params["b3"])
    return jnp.sum(h * params["w4"].T.astype(jnp.float32),
                   axis=-1, keepdims=True) + params["b4"]


if __name__ == "__main__":
    key = jax.random.PRNGKey(0)
    k_params, k_z = jax.random.split(key)

    latent_dim, output_dim, batch = 64, 1, 8
    params = init_params(k_params, latent_dim=latent_dim, output_dim=output_dim)
    z = jax.random.normal(k_z, (batch, latent_dim), jnp.float32)

    out = jax.block_until_ready(disp_predictor_forward(z, params, tile_b=256))
    assert out.shape == (batch, output_dim)

    # Tight check vs. a reference that uses the same bf16 cast pattern.
    ref_bf16 = reference_forward_bf16(z, params)
    assert jnp.allclose(out, ref_bf16, atol=1e-3, rtol=1e-3), "mismatch vs bf16 reference"
    # Loose check vs. the pure-f32 (original-module) forward.
    ref_f32 = reference_forward_f32(z, params)
    assert jnp.allclose(out, ref_f32, atol=5e-2, rtol=5e-2), "mismatch vs f32 reference"

    # Exercise the multi-tile + tail-padding path (B not a multiple of TB).
    z2 = jax.random.normal(jax.random.PRNGKey(1), (200, latent_dim), jnp.float32)
    out2 = jax.block_until_ready(disp_predictor_forward(z2, params, tile_b=64))
    assert out2.shape == (200, output_dim)
    assert jnp.allclose(out2, reference_forward_bf16(z2, params),
                        atol=1e-3, rtol=1e-3), "mismatch on tiled/padded batch"

    print("KERNEL_OK")
</pallas_src>

<mosaic_0001>
module attributes {stable_mosaic.version = 11 : i64} {
  func.func @disp_predictor_kernel(%arg0: i32, %arg1: memref<8x64xbf16, #tpu.memory_space<vmem>>, %arg2: memref<64x128xbf16, #tpu.memory_space<vmem>>, %arg3: memref<1x128xf32, #tpu.memory_space<vmem>>, %arg4: memref<128x64xbf16, #tpu.memory_space<vmem>>, %arg5: memref<1x64xf32, #tpu.memory_space<vmem>>, %arg6: memref<64x32xbf16, #tpu.memory_space<vmem>>, %arg7: memref<1x32xf32, #tpu.memory_space<vmem>>, %arg8: memref<1x32xf32, #tpu.memory_space<vmem>>, %arg9: memref<1x1xf32, #tpu.memory_space<vmem>>, %arg10: memref<8x1xf32, #tpu.memory_space<vmem>>) attributes {dimension_semantics = [#tpu.dimension_semantics<parallel>], iteration_bounds = array<i64: 1>, scalar_prefetch = 0 : i64, scratch_operands = 0 : i64, tpu.core_type = #tpu.core_type<tc>, window_params = [{transform_indices = @transform_0, window_bounds = array<i64: 8, 64>}, {pipeline_mode = #tpu.pipeline_mode<synchronous>, transform_indices = @transform_1, window_bounds = array<i64: 64, 128>}, {pipeline_mode = #tpu.pipeline_mode<synchronous>, transform_indices = @transform_2, window_bounds = array<i64: 1, 128>}, {pipeline_mode = #tpu.pipeline_mode<synchronous>, transform_indices = @transform_3, window_bounds = array<i64: 128, 64>}, {pipeline_mode = #tpu.pipeline_mode<synchronous>, transform_indices = @transform_4, window_bounds = array<i64: 1, 64>}, {pipeline_mode = #tpu.pipeline_mode<synchronous>, transform_indices = @transform_5, window_bounds = array<i64: 64, 32>}, {pipeline_mode = #tpu.pipeline_mode<synchronous>, transform_indices = @transform_6, window_bounds = array<i64: 1, 32>}, {pipeline_mode = #tpu.pipeline_mode<synchronous>, transform_indices = @transform_7, window_bounds = array<i64: 1, 32>}, {pipeline_mode = #tpu.pipeline_mode<synchronous>, transform_indices = @transform_8, window_bounds = array<i64: 1, 1>}, {transform_indices = @transform_9, window_bounds = array<i64: 8, 1>}]} {
    %c0 = arith.constant 0 : index
    %c0_0 = arith.constant 0 : index
    %0 = vector.load %arg1[%c0, %c0_0] : memref<8x64xbf16, #tpu.memory_space<vmem>>, vector<8x64xbf16>
    %c0_1 = arith.constant 0 : index
    %c0_2 = arith.constant 0 : index
    %1 = vector.load %arg2[%c0_1, %c0_2] : memref<64x128xbf16, #tpu.memory_space<vmem>>, vector<64x128xbf16>
    %cst = arith.constant dense<0.000000e+00> : vector<8x128xf32>
    %2 = tpu.matmul %0, %1, %cst {dimension_numbers = #tpu.dot_dimension_numbers<[1], [0], [0], [1], [0, 0, 1, 1], [], []>} : vector<8x64xbf16>, vector<64x128xbf16>, vector<8x128xf32> -> vector<8x128xf32>
    %c0_3 = arith.constant 0 : index
    %c0_4 = arith.constant 0 : index
    %3 = vector.load %arg3[%c0_3, %c0_4] : memref<1x128xf32, #tpu.memory_space<vmem>>, vector<1x128xf32>
    %4 = vector.broadcast %3 : vector<1x128xf32> to vector<8x128xf32>
    %5 = arith.addf %2, %4 : vector<8x128xf32>
    %cst_5 = arith.constant 0.000000e+00 : f32
    %6 = vector.broadcast %cst_5 : f32 to vector<8x128xf32>
    %7 = arith.cmpf ogt, %5, %6 : vector<8x128xf32>
    %cst_6 = arith.constant 0.00999999977 : f32
    %8 = vector.broadcast %cst_6 : f32 to vector<8x128xf32>
    %9 = arith.mulf %8, %5 : vector<8x128xf32>
    %10 = arith.select %7, %5, %9 : vector<8x128xi1>, vector<8x128xf32>
    %11 = arith.truncf %10 : vector<8x128xf32> to vector<8x128xbf16>
    %c0_7 = arith.constant 0 : index
    %c0_8 = arith.constant 0 : index
    %12 = vector.load %arg4[%c0_7, %c0_8] : memref<128x64xbf16, #tpu.memory_space<vmem>>, vector<128x64xbf16>
    %cst_9 = arith.constant dense<0.000000e+00> : vector<8x64xf32>
    %13 = tpu.matmul %11, %12, %cst_9 {dimension_numbers = #tpu.dot_dimension_numbers<[1], [0], [0], [1], [0, 0, 1, 1], [], []>} : vector<8x128xbf16>, vector<128x64xbf16>, vector<8x64xf32> -> vector<8x64xf32>
    %c0_10 = arith.constant 0 : index
    %c0_11 = arith.constant 0 : index
    %14 = vector.load %arg5[%c0_10, %c0_11] : memref<1x64xf32, #tpu.memory_space<vmem>>, vector<1x64xf32>
    %15 = vector.broadcast %14 : vector<1x64xf32> to vector<8x64xf32>
    %16 = arith.addf %13, %15 : vector<8x64xf32>
    %cst_12 = arith.constant 0.000000e+00 : f32
    %17 = vector.broadcast %cst_12 : f32 to vector<8x64xf32>
    %18 = arith.cmpf ogt, %16, %17 : vector<8x64xf32>
    %cst_13 = arith.constant 0.00999999977 : f32
    %19 = vector.broadcast %cst_13 : f32 to vector<8x64xf32>
    %20 = arith.mulf %19, %16 : vector<8x64xf32>
    %21 = arith.select %18, %16, %20 : vector<8x64xi1>, vector<8x64xf32>
    %22 = arith.truncf %21 : vector<8x64xf32> to vector<8x64xbf16>
    %c0_14 = arith.constant 0 : index
    %c0_15 = arith.constant 0 : index
    %23 = vector.load %arg6[%c0_14, %c0_15] : memref<64x32xbf16, #tpu.memory_space<vmem>>, vector<64x32xbf16>
    %cst_16 = arith.constant dense<0.000000e+00> : vector<8x32xf32>
    %24 = tpu.matmul %22, %23, %cst_16 {dimension_numbers = #tpu.dot_dimension_numbers<[1], [0], [0], [1], [0, 0, 1, 1], [], []>} : vector<8x64xbf16>, vector<64x32xbf16>, vector<8x32xf32> -> vector<8x32xf32>
    %c0_17 = arith.constant 0 : index
    %c0_18 = arith.constant 0 : index
    %25 = vector.load %arg7[%c0_17, %c0_18] : memref<1x32xf32, #tpu.memory_space<vmem>>, vector<1x32xf32>
    %26 = vector.broadcast %25 : vector<1x32xf32> to vector<8x32xf32>
    %27 = arith.addf %24, %26 : vector<8x32xf32>
    %cst_19 = arith.constant 0.000000e+00 : f32
    %28 = vector.broadcast %cst_19 : f32 to vector<8x32xf32>
    %29 = arith.cmpf ogt, %27, %28 : vector<8x32xf32>
    %cst_20 = arith.constant 0.00999999977 : f32
    %30 = vector.broadcast %cst_20 : f32 to vector<8x32xf32>
    %31 = arith.mulf %30, %27 : vector<8x32xf32>
    %32 = arith.select %29, %27, %31 : vector<8x32xi1>, vector<8x32xf32>
    %c0_21 = arith.constant 0 : index
    %c0_22 = arith.constant 0 : index
    %33 = vector.load %arg8[%c0_21, %c0_22] : memref<1x32xf32, #tpu.memory_space<vmem>>, vector<1x32xf32>
    %34 = vector.broadcast %33 : vector<1x32xf32> to vector<8x32xf32>
    %35 = arith.mulf %32, %34 : vector<8x32xf32>
    %cst_23 = arith.constant dense<0.000000e+00> : vector<8xf32>
    %36 = vector.multi_reduction <add>, %35, %cst_23 [1] : vector<8x32xf32> to vector<8xf32>
    %37 = vector.shape_cast %36 : vector<8xf32> to vector<8x1xf32>
    %c0_24 = arith.constant 0 : index
    %c0_25 = arith.constant 0 : index
    %38 = vector.load %arg9[%c0_24, %c0_25] : memref<1x1xf32, #tpu.memory_space<vmem>>, vector<1x1xf32>
    %39 = vector.broadcast %38 : vector<1x1xf32> to vector<8x1xf32>
    %40 = arith.addf %37, %39 : vector<8x1xf32>
    %c0_26 = arith.constant 0 : index
    %c0_27 = arith.constant 0 : index
    %41 = vector.load %arg10[%c0_26, %c0_27] : memref<8x1xf32, #tpu.memory_space<vmem>>, vector<8x1xf32>
    tpu.vector_store %arg10[%c0_26, %c0_27], %40 {strides = array<i32>} : memref<8x1xf32, #tpu.memory_space<vmem>>, vector<8x1xf32>,
    return
  }
  func.func @transform_0(%arg0: i32) -> (i32, i32) {
    %c0_i32 = arith.constant 0 : i32
    %c0_i32_0 = arith.constant 0 : i32
    return %arg0, %c0_i32 : i32, i32
  }
  func.func @transform_1(%arg0: i32) -> (i32, i32) {
    %c0_i32 = arith.constant 0 : i32
    %c0_i32_0 = arith.constant 0 : i32
    %c0_i32_1 = arith.constant 0 : i32
    return %c0_i32, %c0_i32_0 : i32, i32
  }
  func.func @transform_2(%arg0: i32) -> (i32, i32) {
    %c0_i32 = arith.constant 0 : i32
    %c0_i32_0 = arith.constant 0 : i32
    %c0_i32_1 = arith.constant 0 : i32
    return %c0_i32, %c0_i32_0 : i32, i32
  }
  func.func @transform_3(%arg0: i32) -> (i32, i32) {
    %c0_i32 = arith.constant 0 : i32
    %c0_i32_0 = arith.constant 0 : i32
    %c0_i32_1 = arith.constant 0 : i32
    return %c0_i32, %c0_i32_0 : i32, i32
  }
  func.func @transform_4(%arg0: i32) -> (i32, i32) {
    %c0_i32 = arith.constant 0 : i32
    %c0_i32_0 = arith.constant 0 : i32
    %c0_i32_1 = arith.constant 0 : i32
    return %c0_i32, %c0_i32_0 : i32, i32
  }
  func.func @transform_5(%arg0: i32) -> (i32, i32) {
    %c0_i32 = arith.constant 0 : i32
    %c0_i32_0 = arith.constant 0 : i32
    %c0_i32_1 = arith.constant 0 : i32
    return %c0_i32, %c0_i32_0 : i32, i32
  }
  func.func @transform_6(%arg0: i32) -> (i32, i32) {
    %c0_i32 = arith.constant 0 : i32
    %c0_i32_0 = arith.constant 0 : i32
    %c0_i32_1 = arith.constant 0 : i32
    return %c0_i32, %c0_i32_0 : i32, i32
  }
  func.func @transform_7(%arg0: i32) -> (i32, i32) {
    %c0_i32 = arith.constant 0 : i32
    %c0_i32_0 = arith.constant 0 : i32
    %c0_i32_1 = arith.constant 0 : i32
    return %c0_i32, %c0_i32_0 : i32, i32
  }
  func.func @transform_8(%arg0: i32) -> (i32, i32) {
    %c0_i32 = arith.constant 0 : i32
    %c0_i32_0 = arith.constant 0 : i32
    %c0_i32_1 = arith.constant 0 : i32
    return %c0_i32, %c0_i32_0 : i32, i32
  }
  func.func @transform_9(%arg0: i32) -> (i32, i32) {
    %c0_i32 = arith.constant 0 : i32
    %c0_i32_0 = arith.constant 0 : i32
    return %arg0, %c0_i32 : i32, i32
  }
}

</mosaic_0001>

<llo_original>
// kernel: tpu_custom_call.1
$region0: #{tpu_custom_call.1}
  #allocation0 [shape = 'u32[]', space=smem, size = 0x4, offset = 0x4, fixed_abs, tag = 'smem constant byte address 0x4 - core index']
  #allocation1 [shape = 'u32[72,128]{1,0:T(1,128)}', space=vmem, size = 0x9000, scoped, tag = 'internal scratch']
  #allocation2 [shape = 'f32[1,1]{1,0:T(1,128)S(1)}', space=vmem, size = 0x200, scoped, tag = 'scoped memory for tpu_custom_call.1']
  %s0 = inlined_call_operand.vmem [shape: bf16[8,64], index: 0, kind: input, shape index: {}]
  %s1 = inlined_call_operand.vmem [shape: bf16[64,128], index: 1, kind: input, shape index: {}]
  %s2 = inlined_call_operand.vmem [shape: f32[1,128], index: 2, kind: input, shape index: {}]
  %s3 = inlined_call_operand.vmem [shape: bf16[128,64], index: 3, kind: input, shape index: {}]
  %s4 = inlined_call_operand.vmem [shape: f32[1,64], index: 4, kind: input, shape index: {}]
  %s5 = inlined_call_operand.vmem [shape: bf16[64,32], index: 5, kind: input, shape index: {}]
  %s6 = inlined_call_operand.vmem [shape: f32[1,32], index: 6, kind: input, shape index: {}]
  %s7 = inlined_call_operand.vmem [shape: f32[1,32], index: 7, kind: input, shape index: {}]
  %s8 = inlined_call_operand.<no memory space> [shape: f32[1,1], index: 8, kind: input, shape index: {}]
  %s9 = inlined_call_operand.vmem [shape: f32[8,1], index: 9, kind: output, shape index: {}]
  %s10 = sld [smem:[#allocation0]]
  $region46: #{tpu_custom_call.1} parent=0
    _
  %s12 = ssub.s32 1, %s10
  %s13 = scalar_select 0, %s12, %s10
  %v14 = vstv %s8
  %15 = vst [vmem:[#allocation2] sm:$0x1] %v14
  // Predicated region
  $region2: #{tpu_custom_call.1} parent=0 // pred_check
    _
  $region3: #{tpu_custom_call.1} parent=0 // pred_check_branch
    %17 = sbr.rel (0) target = $region5
  $region4: #{tpu_custom_call.1} parent=0 // pred_region
    _
  $region5: #{tpu_custom_call.1} parent=0 // pred_fallthru
    _
  // Predicated region
  $region6: #{tpu_custom_call.1} parent=0 // pred_check
    _
  $region7: #{tpu_custom_call.1} parent=0 // pred_check_branch
    %19 = sbr.rel (0) target = $region9
  $region8: #{tpu_custom_call.1} parent=0 // pred_region
    _
  $region9: #{tpu_custom_call.1} parent=0 // pred_fallthru
    _
  // Predicated region
  $region10: #{tpu_custom_call.1} parent=0 // pred_check
    _
  $region11: #{tpu_custom_call.1} parent=0 // pred_check_branch
    %21 = sbr.rel (0) target = $region13
  $region12: #{tpu_custom_call.1} parent=0 // pred_region
    _
  $region13: #{tpu_custom_call.1} parent=0 // pred_fallthru
    _
  // Predicated region
  $region14: #{tpu_custom_call.1} parent=0 // pred_check
    _
  $region15: #{tpu_custom_call.1} parent=0 // pred_check_branch
    %23 = sbr.rel (0) target = $region17
  $region16: #{tpu_custom_call.1} parent=0 // pred_region
    _
  $region17: #{tpu_custom_call.1} parent=0 // pred_fallthru
    _
  // Predicated region
  $region18: #{tpu_custom_call.1} parent=0 // pred_check
    _
  $region19: #{tpu_custom_call.1} parent=0 // pred_check_branch
    %25 = sbr.rel (0) target = $region21
  $region20: #{tpu_custom_call.1} parent=0 // pred_region
    _
  $region21: #{tpu_custom_call.1} parent=0 // pred_fallthru
    _
  // Predicated region
  $region22: #{tpu_custom_call.1} parent=0 // pred_check
    _
  $region23: #{tpu_custom_call.1} parent=0 // pred_check_branch
    %27 = sbr.rel (0) target = $region25
  $region24: #{tpu_custom_call.1} parent=0 // pred_region
    _
  $region25: #{tpu_custom_call.1} parent=0 // pred_fallthru
    _
  // Predicated region
  $region26: #{tpu_custom_call.1} parent=0 // pred_check
    _
  $region27: #{tpu_custom_call.1} parent=0 // pred_check_branch
    %29 = sbr.rel (0) target = $region29
  $region28: #{tpu_custom_call.1} parent=0 // pred_region
    _
  $region29: #{tpu_custom_call.1} parent=0 // pred_fallthru
    _
  // Predicated region
  $region30: #{tpu_custom_call.1} parent=0 // pred_check
    _
  $region31: #{tpu_custom_call.1} parent=0 // pred_check_branch
    %31 = sbr.rel (0) target = $region33
  $region32: #{tpu_custom_call.1} parent=0 // pred_region
    _
  $region33: #{tpu_custom_call.1} parent=0 // pred_fallthru
    _
  // Predicated region
  $region34: #{tpu_custom_call.1} parent=0 // pred_check
    _
  $region35: #{tpu_custom_call.1} parent=0 // pred_check_branch
    %33 = sbr.rel (0) target = $region37
  $region36: #{tpu_custom_call.1} parent=0 // pred_region
    _
  $region37: #{tpu_custom_call.1} parent=0 // pred_fallthru
    _
  %v35 = vld [vmem:[%s0] sm:$0xf]
  %v36 = vld [vmem:[%s1] sm:$0xf]
  %v37 = vld [vmem:[%s1 + $0x4] sm:$0xf]
  %v38 = vld [vmem:[%s1 + $0x8] sm:$0xf]
  %v39 = vld [vmem:[%s1 + $0xc] sm:$0xf]
  %v40 = vld [vmem:[%s1 + $0x10] sm:$0xf]
  %v41 = vld [vmem:[%s1 + $0x14] sm:$0xf]
  %v42 = vld [vmem:[%s1 + $0x18] sm:$0xf]
  %v43 = vld [vmem:[%s1 + $0x1c] sm:$0xf]
  %v44 = vld [vmem:[%s2] sm:$0x1]
  %v46 = vperm.slane %v44, 0
  %v56 = vunpack.c.l.b16 %v36
  %v57 = vunpack.c.l.b16 %v37
  %v58 = vunpack.c.l.b16 %v38
  %v59 = vunpack.c.l.b16 %v39
  %v60 = vunpack.c.l.b16 %v40
  %v61 = vunpack.c.l.b16 %v41
  %v62 = vunpack.c.l.b16 %v42
  %v63 = vunpack.c.l.b16 %v43
  %v64 = vpack.c.b16 %v57, %v56
  %v65 = vpack.c.b16 %v59, %v58
  %v66 = vpack.c.b16 %v61, %v60
  %v67 = vpack.c.b16 %v63, %v62
  %vm72 = vcmask 523264
  %v74 = vsel %vm72, %v35, 0
  %76 = vmatpush.bf16.msra.mxu0 0
  %77 = vmatpush.bf16.msra.mxu0 0
  %78 = vmatpush.bf16.msra.mxu0 0
  %79 = vmatpush.bf16.msra.mxu0 0
  %80 = vmatpush.bf16.msra.mxu0 %v67
  %81 = vmatpush.bf16.msra.mxu0 %v66
  %82 = vmatpush.bf16.msra.mxu0 %v65
  %83 = vmatpush.bf16.msra.mxu0 %v64
  %84 = vmatmul.bf16.gmra.mxu0 %v74
  %v85 = vpop.f32.mrf.mxu0
  %v86 = vadd.f32 %v46, %v85
  %v87 = vpop.f32.mrf.mxu0
  %88 = vdwg.mxu0
  %vm89 = vcmp.gt.f32.partialorder %v86, 0.0
  %v90 = vmul.f32 %v86, 0.01
  %v91 = vsel %vm89, %v86, %v90
  %v92 = vpack.c.bf16 %v91, %v91
  %v93 = vld [vmem:[%s3] sm:$0xf]
  %v94 = vld [vmem:[%s3 + $0x4] sm:$0xf]
  %v95 = vld [vmem:[%s3 + $0x8] sm:$0xf]
  %v96 = vld [vmem:[%s3 + $0xc] sm:$0xf]
  %v97 = vld [vmem:[%s3 + $0x10] sm:$0xf]
  %v98 = vld [vmem:[%s3 + $0x14] sm:$0xf]
  %v99 = vld [vmem:[%s3 + $0x18] sm:$0xf]
  %v100 = vld [vmem:[%s3 + $0x1c] sm:$0xf]
  %v101 = vld [vmem:[%s3 + $0x20] sm:$0xf]
  %v102 = vld [vmem:[%s3 + $0x24] sm:$0xf]
  %v103 = vld [vmem:[%s3 + $0x28] sm:$0xf]
  %v104 = vld [vmem:[%s3 + $0x2c] sm:$0xf]
  %v105 = vld [vmem:[%s3 + $0x30] sm:$0xf]
  %v106 = vld [vmem:[%s3 + $0x34] sm:$0xf]
  %v107 = vld [vmem:[%s3 + $0x38] sm:$0xf]
  %v108 = vld [vmem:[%s3 + $0x3c] sm:$0xf]
  %v109 = vld [vmem:[%s4] sm:$0x1]
  %v111 = vperm.slane %v109, 0
  %v129 = vunpack.c.l.b16 %v93
  %v130 = vunpack.c.l.b16 %v94
  %v131 = vunpack.c.l.b16 %v95
  %v132 = vunpack.c.l.b16 %v96
  %v133 = vunpack.c.l.b16 %v97
  %v134 = vunpack.c.l.b16 %v98
  %v135 = vunpack.c.l.b16 %v99
  %v136 = vunpack.c.l.b16 %v100
  %v137 = vunpack.c.l.b16 %v101
  %v138 = vunpack.c.l.b16 %v102
  %v139 = vunpack.c.l.b16 %v103
  %v140 = vunpack.c.l.b16 %v104
  %v141 = vunpack.c.l.b16 %v105
  %v142 = vunpack.c.l.b16 %v106
  %v143 = vunpack.c.l.b16 %v107
  %v144 = vunpack.c.l.b16 %v108
  %v145 = vpack.c.b16 %v130, %v129
  %v146 = vpack.c.b16 %v132, %v131
  %v147 = vpack.c.b16 %v134, %v133
  %v148 = vpack.c.b16 %v136, %v135
  %v149 = vpack.c.b16 %v138, %v137
  %v150 = vpack.c.b16 %v140, %v139
  %v151 = vpack.c.b16 %v142, %v141
  %v152 = vpack.c.b16 %v144, %v143
  %161 = vmatpush.bf16.msra.mxu0 %v152
  %162 = vmatpush.bf16.msra.mxu0 %v151
  %163 = vmatpush.bf16.msra.mxu0 %v150
  %164 = vmatpush.bf16.msra.mxu0 %v149
  %165 = vmatpush.bf16.msra.mxu0 %v148
  %166 = vmatpush.bf16.msra.mxu0 %v147
  %167 = vmatpush.bf16.msra.mxu0 %v146
  %168 = vmatpush.bf16.msra.mxu0 %v145
  %169 = vmatmul.bf16.gmra.mxu0 %v92
  %v170 = vpop.f32.mrf.mxu0
  %v171 = vadd.f32 %v111, %v170
  %v172 = vpop.f32.mrf.mxu0
  %173 = vdwg.mxu0
  %vm174 = vcmp.gt.f32.partialorder %v171, 0.0
  %v175 = vmul.f32 %v171, 0.01
  %v176 = vsel %vm174, %v171, %v175
  %v177 = vpack.c.bf16 %v176, %v176
  %v178 = vld [vmem:[%s5] sm:$0xf]
  %v179 = vld [vmem:[%s5 + $0x4] sm:$0xf]
  %v180 = vld [vmem:[%s5 + $0x8] sm:$0xf]
  %v181 = vld [vmem:[%s5 + $0xc] sm:$0xf]
  %v182 = vld [vmem:[%s5 + $0x10] sm:$0xf]
  %v183 = vld [vmem:[%s5 + $0x14] sm:$0xf]
  %v184 = vld [vmem:[%s5 + $0x18] sm:$0xf]
  %v185 = vld [vmem:[%s5 + $0x1c] sm:$0xf]
  %v186 = vld [vmem:[%s6] sm:$0x1]
  %v188 = vperm.slane %v186, 0
  %v198 = vunpack.c.l.b16 %v178
  %v199 = vunpack.c.l.b16 %v179
  %v200 = vunpack.c.l.b16 %v180
  %v201 = vunpack.c.l.b16 %v181
  %v202 = vunpack.c.l.b16 %v182
  %v203 = vunpack.c.l.b16 %v183
  %v204 = vunpack.c.l.b16 %v184
  %v205 = vunpack.c.l.b16 %v185
  %v206 = vpack.c.b16 %v199, %v198
  %v207 = vpack.c.b16 %v201, %v200
  %v208 = vpack.c.b16 %v203, %v202
  %v209 = vpack.c.b16 %v205, %v204
  %v215 = vsel %vm72, %v177, 0
  %217 = vmatpush.bf16.msra.mxu0 0
  %218 = vmatpush.bf16.msra.mxu0 0
  %219 = vmatpush.bf16.msra.mxu0 0
  %220 = vmatpush.bf16.msra.mxu0 0
  %221 = vmatpush.bf16.msra.mxu0 %v209
  %222 = vmatpush.bf16.msra.mxu0 %v208
  %223 = vmatpush.bf16.msra.mxu0 %v207
  %224 = vmatpush.bf16.msra.mxu0 %v206
  %225 = vmatmul.bf16.gmra.mxu0 %v215
  %v226 = vpop.f32.mrf.mxu0
  %v227 = vadd.f32 %v188, %v226
  %v228 = vpop.f32.mrf.mxu0
  %229 = vdwg.mxu0
  %vm230 = vcmp.gt.f32.partialorder %v227, 0.0
  %v231 = vmul.f32 %v227, 0.01
  %v232 = vsel %vm230, %v227, %v231
  %v233 = vld [vmem:[%s7] sm:$0x1]
  %v235 = vperm.slane %v233, 0
  %v237 = vmul.f32 %v232, %v235
  %vm238 = vcmask 261120
  %v239 = vsel %vm238, %v237, 0.0
  %240 = vadd.xlane.f32.xlu0 %v239
  %v241 = vpop.xlane.xlu0 %240
  %v242 = vld [vmem:[#allocation2] sm:$0x1]
  %v244 = vperm.slane %v242, 0
  %v246 = vadd.f32 %v241, %v244
  %vm247 = vcmask 7168
  %248 = vst.msk [vmem:[%s9] sm:$0xff] %vm247, %v246
  // Predicated region
  $region38: #{tpu_custom_call.1} parent=0 // pred_check
    _
  $region39: #{tpu_custom_call.1} parent=0 // pred_check_branch
    %250 = sbr.rel (0) target = $region41
  $region40: #{tpu_custom_call.1} parent=0 // pred_region
    _
  $region41: #{tpu_custom_call.1} parent=0 // pred_fallthru
    _
  // Predicated region
  $region42: #{tpu_custom_call.1} parent=0 // pred_check
    _
  $region43: #{tpu_custom_call.1} parent=0 // pred_check_branch
    %252 = sbr.rel (0) target = $region45
  $region44: #{tpu_custom_call.1} parent=0 // pred_region
    _
  $region45: #{tpu_custom_call.1} parent=0 // pred_fallthru
    _

</llo_original>
